<compile_context>
chip_gen: v7x
topology: tpu7x:2x2x1
jax: 0.10.0
libtpu: 0.0.40
codegen_flags: <defaults>
</compile_context>

<pallas_src>
import math

import jax
import jax.numpy as jnp
from jax import lax
from jax.experimental import pallas as pl
from jax.experimental.pallas import tpu as pltpu


def _fixed_embedding_kernel(idx_ref, table_ref, o_ref):
    # idx_ref: (TM, 1) int32, table_ref: (C, D) f32, o_ref: (TM, D)
    tm = idx_ref.shape[0]
    c = table_ref.shape[0]
    idx = idx_ref[...]                                       # (TM, 1)
    k = lax.broadcasted_iota(jnp.int32, (tm, c), 1)          # (TM, C)
    onehot = (idx == k).astype(table_ref.dtype)              # (TM, C) exact one-hot rows
    y = jnp.dot(onehot, table_ref[...], preferred_element_type=jnp.float32)
    o_ref[...] = y.astype(o_ref.dtype)


def _round_up(a, b):
    return (a + b - 1) // b * b


def make_fixed_embedding_table(c_in, d_model):
    """Exactly the PyTorch FixedEmbedding table (non-learned, sinusoidal)."""
    position = jnp.arange(c_in, dtype=jnp.float32)[:, None]                  # (c_in, 1)
    div_term = jnp.exp(jnp.arange(0, d_model, 2, dtype=jnp.float32)
                       * (-math.log(10000.0) / d_model))                     # (d_model//2,)
    angles = position * div_term                                             # (c_in, d_model//2)
    w = jnp.zeros((c_in, d_model), dtype=jnp.float32)
    w = w.at[:, 0::2].set(jnp.sin(angles))
    w = w.at[:, 1::2].set(jnp.cos(angles))
    return w


def fixed_embedding(x_idx, table, block_rows=256):
    """x_idx: int tensor (any shape) with values in [0, c_in); table: [c_in, d_model]."""
    c_in, d_model = table.shape
    lead_shape = x_idx.shape
    m = 1
    for s in lead_shape:
        m *= int(s)

    tm = min(block_rows, _round_up(m, 8))
    m_pad = _round_up(m, tm)

    idx = x_idx.reshape(-1).astype(jnp.int32)
    if m_pad != m:
        idx = jnp.pad(idx, (0, m_pad - m))
    idx2d = idx.reshape(m_pad, 1)

    cost = pl.CostEstimate(
        flops=2 * m_pad * c_in * d_model,
        transcendentals=0,
        bytes_accessed=idx2d.size * 4 + table.size * 4 + m_pad * d_model * 4,
    )

    out = pl.pallas_call(
        _fixed_embedding_kernel,
        out_shape=jax.ShapeDtypeStruct((m_pad, d_model), table.dtype),
        grid_spec=pltpu.PrefetchScalarGridSpec(
            num_scalar_prefetch=0,
            grid=(m_pad // tm,),
            in_specs=[
                pl.BlockSpec((tm, 1), lambda i: (i, 0)),              # flattened indices
                pl.BlockSpec((c_in, d_model), lambda i: (0, 0)),      # table: VMEM-resident
            ],
            out_specs=pl.BlockSpec((tm, d_model), lambda i: (i, 0)),  # lane-dense output slab
        ),
        compiler_params=pltpu.CompilerParams(
            dimension_semantics=("parallel",),
        ),
        cost_estimate=cost,
    )(idx2d, table)

    out = out[:m].reshape(*lead_shape, d_model)
    # TODO(synk): .detach()/requires_grad=False is autograd-only; forward values are identical.
    return out


if __name__ == "__main__":
    # Small shapes consistent with FixedEmbedding usage (e.g. hour-of-day temporal embedding):
    #   c_in = 24 vocabulary, d_model = 32, integer indices of shape [B=2, L=16].
    B, L, C_IN, D_MODEL = 2, 16, 24, 32

    key = jax.random.PRNGKey(0)
    x = jax.random.randint(key, (B, L), minval=0, maxval=C_IN, dtype=jnp.int32)

    table = make_fixed_embedding_table(C_IN, D_MODEL)

    out = fixed_embedding(x, table)
    out = jax.block_until_ready(out)

    # Reference (plain JAX gather) to ensure semantics match the PyTorch module.
    ref = jnp.take(table, x, axis=0)
    assert out.shape == (B, L, D_MODEL)
    assert jnp.allclose(out, ref, atol=1e-6, rtol=1e-6)

    print("KERNEL_OK")
</pallas_src>

<mosaic_0001>
module attributes {stable_mosaic.version = 11 : i64} {
  func.func @_fixed_embedding_kernel(%arg0: i32, %arg1: memref<32x1xi32, #tpu.memory_space<vmem>>, %arg2: memref<24x32xf32, #tpu.memory_space<vmem>>, %arg3: memref<32x32xf32, #tpu.memory_space<vmem>>) attributes {dimension_semantics = [#tpu.dimension_semantics<parallel>], iteration_bounds = array<i64: 1>, scalar_prefetch = 0 : i64, scratch_operands = 0 : i64, tpu.core_type = #tpu.core_type<tc>, window_params = [{transform_indices = @transform_0, window_bounds = array<i64: 32, 1>}, {pipeline_mode = #tpu.pipeline_mode<synchronous>, transform_indices = @transform_1, window_bounds = array<i64: 24, 32>}, {transform_indices = @transform_2, window_bounds = array<i64: 32, 32>}]} {
    %c0 = arith.constant 0 : index
    %c0_0 = arith.constant 0 : index
    %0 = vector.load %arg1[%c0, %c0_0] : memref<32x1xi32, #tpu.memory_space<vmem>>, vector<32x1xi32>
    %1 = tpu.iota {dimensions = array<i32: 1>} : vector<32x24xi32>
    %2 = vector.broadcast %0 : vector<32x1xi32> to vector<32x24xi32>
    %3 = arith.cmpi eq, %2, %1 : vector<32x24xi32>
    %4 = arith.extui %3 : vector<32x24xi1> to vector<32x24xi32>
    %5 = arith.sitofp %4 : vector<32x24xi32> to vector<32x24xf32>
    %c0_1 = arith.constant 0 : index
    %c0_2 = arith.constant 0 : index
    %6 = vector.load %arg2[%c0_1, %c0_2] : memref<24x32xf32, #tpu.memory_space<vmem>>, vector<24x32xf32>
    %cst = arith.constant dense<0.000000e+00> : vector<32x32xf32>
    %7 = tpu.matmul %5, %6, %cst {dimension_numbers = #tpu.dot_dimension_numbers<[1], [0], [0], [1], [0, 0, 1, 1], [], []>} : vector<32x24xf32>, vector<24x32xf32>, vector<32x32xf32> -> vector<32x32xf32>
    %c0_3 = arith.constant 0 : index
    %c0_4 = arith.constant 0 : index
    %8 = vector.load %arg3[%c0_3, %c0_4] : memref<32x32xf32, #tpu.memory_space<vmem>>, vector<32x32xf32>
    tpu.vector_store %arg3[%c0_3, %c0_4], %7 {strides = array<i32>} : memref<32x32xf32, #tpu.memory_space<vmem>>, vector<32x32xf32>,
    return
  }
  func.func @transform_0(%arg0: i32) -> (i32, i32) {
    %c0_i32 = arith.constant 0 : i32
    %c0_i32_0 = arith.constant 0 : i32
    return %arg0, %c0_i32 : i32, i32
  }
  func.func @transform_1(%arg0: i32) -> (i32, i32) {
    %c0_i32 = arith.constant 0 : i32
    %c0_i32_0 = arith.constant 0 : i32
    %c0_i32_1 = arith.constant 0 : i32
    return %c0_i32, %c0_i32_0 : i32, i32
  }
  func.func @transform_2(%arg0: i32) -> (i32, i32) {
    %c0_i32 = arith.constant 0 : i32
    %c0_i32_0 = arith.constant 0 : i32
    return %arg0, %c0_i32 : i32, i32
  }
}

</mosaic_0001>

<llo_original>
// kernel: tpu_custom_call.1
$region0: #{tpu_custom_call.1}
  #allocation0 [shape = 'u32[]', space=smem, size = 0x4, offset = 0x4, fixed_abs, tag = 'smem constant byte address 0x4 - core index']
  #allocation1 [shape = 'u32[144,128]{1,0:T(1,128)}', space=vmem, size = 0x12000, scoped, tag = 'internal scratch']
  %s0 = inlined_call_operand.vmem [shape: s32[32,1], index: 0, kind: input, shape index: {}]
  %s1 = inlined_call_operand.vmem [shape: f32[24,32], index: 1, kind: input, shape index: {}]
  %s2 = inlined_call_operand.hbm [shape: f32[32,32], index: 2, kind: output, shape index: {}]
  %s3 = sld [smem:[#allocation0]]
  $region18: #{tpu_custom_call.1} parent=0
    _
  %s5 = ssub.s32 1, %s3
  %s6 = scalar_select 0, %s5, %s3
  $region1: #{tpu_custom_call.1} parent=0
    #allocation2 [shape = 'u8[16384]{0}', space=vmem, size = 0x4000, scoped, tag = 'output window, operand 0, single buffered']
    #allocation3 [shape = 's32[1]{0}', space=sflag, size = 0x4, scoped, tag = 'scoped memory for tpu_custom_call.1']
    %7 = vsyncpa [#allocation3], 0
    // Predicated region
    $region2: #{tpu_custom_call.1} parent=1 // pred_check
      _
    $region3: #{tpu_custom_call.1} parent=1 // pred_check_branch
      %9 = sbr.rel (0) target = $region5
    $region4: #{tpu_custom_call.1} parent=1 // pred_region
      _
    $region5: #{tpu_custom_call.1} parent=1 // pred_fallthru
      _
    // Predicated region
    $region6: #{tpu_custom_call.1} parent=1 // pred_check
      _
    $region7: #{tpu_custom_call.1} parent=1 // pred_check_branch
      %11 = sbr.rel (0) target = $region9
    $region8: #{tpu_custom_call.1} parent=1 // pred_region
      _
    $region9: #{tpu_custom_call.1} parent=1 // pred_fallthru
      _
    %v12 = vld [vmem:[%s0] sm:$0xff]
    %v13 = vld [vmem:[%s0 + $0x8] sm:$0xff]
    %v14 = vld [vmem:[%s0 + $0x10] sm:$0xff]
    %v15 = vld [vmem:[%s0 + $0x18] sm:$0xff]
    %v16 = vlaneseq
    %v17 = vand.u32 %v16, 127
    %18 = vset.pattern.permute.xlu0 0
    %19 = vperm.xlu0 %18, %v12
    %v20 = vpop.permute.xlu0 %19
    %21 = vset.pattern.permute.xlu0 0
    %22 = vperm.xlu0 %21, %v13
    %v23 = vpop.permute.xlu0 %22
    %24 = vset.pattern.permute.xlu0 0
    %25 = vperm.xlu0 %24, %v14
    %v26 = vpop.permute.xlu0 %25
    %27 = vset.pattern.permute.xlu0 0
    %28 = vperm.xlu0 %27, %v15
    %v29 = vpop.permute.xlu0 %28
    %vm30 = vcmp.eq.s32.totalorder %v20, %v17
    %vm31 = vcmp.eq.s32.totalorder %v23, %v17
    %vm32 = vcmp.eq.s32.totalorder %v26, %v17
    %vm33 = vcmp.eq.s32.totalorder %v29, %v17
    %v34 = vsel %vm30, 1, 0
    %v35 = vsel %vm31, 1, 0
    %v36 = vsel %vm32, 1, 0
    %v37 = vsel %vm33, 1, 0
    %v38 = vcvt.s32.f32 %v34
    %v39 = vcvt.s32.f32 %v35
    %v40 = vcvt.s32.f32 %v36
    %v41 = vcvt.s32.f32 %v37
    %v42 = vld [vmem:[%s1] sm:$0xff]
    %v43 = vld [vmem:[%s1 + $0x8] sm:$0xff]
    %v44 = vld [vmem:[%s1 + $0x10] sm:$0xff]
    %vm45 = vcmask 195584
    %v47 = vsel %vm45, %v38, 0
    %v50 = vsel %vm45, %v39, 0
    %v53 = vsel %vm45, %v40, 0
    %v56 = vsel %vm45, %v41, 0
    %58 = vmatprep.subr.mxu0 0.0
    %59 = vmatpush1.msra.mxu0 %v42
    %60 = vmatprep.subr.mxu0 0.0
    %61 = vmatpush1.msra.mxu0 %v43
    %62 = vmatprep.subr.mxu0 0.0
    %63 = vmatpush1.msra.mxu0 %v44
    %64 = vmatprep.subr.mxu0 0.0
    %65 = vmatpush1.msra.mxu0 0.0
    %66 = vmatprep.subr.mxu0 0.0
    %67 = vmatpush1.msra.mxu0 0.0
    %68 = vmatprep.subr.mxu0 0.0
    %69 = vmatpush1.msra.mxu0 0.0
    %70 = vmatprep.subr.mxu0 0.0
    %71 = vmatpush1.msra.mxu0 0.0
    %72 = vmatprep.subr.mxu0 0.0
    %73 = vmatpush1.msra.mxu0 0.0
    %74 = vmatprep.subr.mxu0 0.0
    %75 = vmatpush1.msra.mxu0 0.0
    %76 = vmatprep.subr.mxu0 0.0
    %77 = vmatpush1.msra.mxu0 0.0
    %78 = vmatprep.subr.mxu0 0.0
    %79 = vmatpush1.msra.mxu0 0.0
    %80 = vmatprep.subr.mxu0 0.0
    %81 = vmatpush1.msra.mxu0 0.0
    %82 = vmatprep.subr.mxu0 0.0
    %83 = vmatpush1.msra.mxu0 0.0
    %84 = vmatprep.subr.mxu0 0.0
    %85 = vmatpush1.msra.mxu0 0.0
    %86 = vmatprep.subr.mxu0 0.0
    %87 = vmatpush1.msra.mxu0 0.0
    %88 = vmatprep.subr.mxu0 0.0
    %89 = vmatpush1.msra.mxu0 0.0
    %90 = vmatprep.subr.mxu0 0.0
    %91 = vmatpush1.msra.mxu0 0.0
    %92 = vmatprep.subr.mxu0 0.0
    %93 = vmatpush1.msra.mxu0 0.0
    %94 = vmatprep.subr.mxu0 0.0
    %95 = vmatpush1.msra.mxu0 0.0
    %96 = vmatprep.subr.mxu0 0.0
    %97 = vmatpush1.msra.mxu0 0.0
    %98 = vmatprep.subr.mxu0 0.0
    %99 = vmatpush1.msra.mxu0 0.0
    %100 = vmatprep.subr.mxu0 0.0
    %101 = vmatpush1.msra.mxu0 0.0
    %102 = vmatprep.subr.mxu0 0.0
    %103 = vmatpush1.msra.mxu0 0.0
    %104 = vmatprep.subr.mxu0 0.0
    %105 = vmatpush1.msra.mxu0 0.0
    %106 = vmatprep.subr.mxu0 0.0
    %107 = vmatpush1.msra.mxu0 0.0
    %108 = vmatprep.subr.mxu0 0.0
    %109 = vmatpush1.msra.mxu0 0.0
    %110 = vmatprep.subr.mxu0 0.0
    %111 = vmatpush1.msra.mxu0 0.0
    %112 = vmatprep.subr.mxu0 0.0
    %113 = vmatpush1.msra.mxu0 0.0
    %114 = vmatprep.subr.mxu0 0.0
    %115 = vmatpush1.msra.mxu0 0.0
    %116 = vmatprep.subr.mxu0 0.0
    %117 = vmatpush1.msra.mxu0 0.0
    %118 = vmatprep.subr.mxu0 0.0
    %119 = vmatpush1.msra.mxu0 0.0
    %120 = vmatprep.subr.mxu0 0.0
    %121 = vmatpush1.msra.mxu0 0.0
    %122 = vmatprep.mubr.f32.mxu0 0.0
    %123 = vmatmul.mubr.f32.gmra.mrb[0].mxu0 %v47
    %v124 = vpop.f32.mrb[0].mxu0
    %v125 = vadd.f32 0.0, %v124
    %v126 = vpop.f32.mrb[0].mxu0
    %127 = vmatprep.mubr.f32.mxu0 0.0
    %128 = vmatmul.mubr.f32.gmra.mrb[0].mxu0 %v50
    %v129 = vpop.f32.mrb[0].mxu0
    %v130 = vadd.f32 0.0, %v129
    %v131 = vpop.f32.mrb[0].mxu0
    %132 = vmatprep.mubr.f32.mxu0 0.0
    %133 = vmatmul.mubr.f32.gmra.mrb[0].mxu0 %v53
    %v134 = vpop.f32.mrb[0].mxu0
    %v135 = vadd.f32 0.0, %v134
    %v136 = vpop.f32.mrb[0].mxu0
    %137 = vmatprep.mubr.f32.mxu0 0.0
    %138 = vmatmul.mubr.f32.gmra.mrb[0].mxu0 %v56
    %v139 = vpop.f32.mrb[0].mxu0
    %v140 = vadd.f32 0.0, %v139
    %v141 = vpop.f32.mrb[0].mxu0
    %142 = vdwg.mxu0
    %vm143 = vcmask 261120
    %144 = vst.msk [vmem:[#allocation2] sm:$0xff] %vm143, %v125
    %145 = vst.msk [vmem:[#allocation2 + $0x8] sm:$0xff] %vm143, %v130
    %146 = vst.msk [vmem:[#allocation2 + $0x10] sm:$0xff] %vm143, %v135
    %147 = vst.msk [vmem:[#allocation2 + $0x18] sm:$0xff] %vm143, %v140
    // Predicated region
    $region10: #{tpu_custom_call.1} parent=1 // pred_check
      _
    $region11: #{tpu_custom_call.1} parent=1 // pred_check_branch
      %149 = sbr.rel (0) target = $region13
    $region12: #{tpu_custom_call.1} parent=1 // pred_region
      %s151 = ssub.s32 512, 512
      %152 = vsyncadd [#allocation3], %s151
      %s153 = sshll.u32 [#allocation2], 4
      %s154 = int_to_ptr.vmem [resolvable:$true] %s153
      %159 = dma.vmem_to_hbm [thread:$0]  %s154, 512, %s2, [#allocation3], 128, 128, 8
    $region13: #{tpu_custom_call.1} parent=1 // pred_fallthru
      _
    // Predicated region
    $region14: #{tpu_custom_call.1} parent=1 // pred_check
      _
    $region15: #{tpu_custom_call.1} parent=1 // pred_check_branch
      %161 = sbr.rel (0) target = $region17
    $region16: #{tpu_custom_call.1} parent=1 // pred_region
      %162 = dma.done [#allocation3], 512
    $region17: #{tpu_custom_call.1} parent=1 // pred_fallthru
      _
    %163 = vsyncpa [#allocation3], 1

</llo_original>
